<compile_context>
chip_gen: v5e
topology: v5e:2x2
jax: 0.10.0
libtpu: 0.0.40
codegen_flags: <defaults>
</compile_context>

<pallas_src>
import functools

import numpy as np
import jax
import jax.numpy as jnp
from jax.experimental import pallas as pl
from jax.experimental.pallas import tpu as pltpu


_VMEM_LIMIT = 32 * 1024 * 1024  # scoped-VMEM budget, safe on v5e/v6e/v7x


def _round_up(n, m):
    return ((n + m - 1) // m) * m


def _choose_tm(rows):
    """Adaptive row tile (multiple of 16): single tile for small slabs."""
    if rows <= 512:
        return _round_up(max(rows, 16), 16)
    if rows <= 4096:
        return 256
    return 512


# ----------------------------------------------------------------------------
# Fused Pallas MLP kernel:
#   y = [res +] LN?( SiLU( sum_k X_k @ W1_k + b1 ) @ W2 + b2 )
#   optionally followed (fused, tile stays in VMEM) by a second MLP:
#   y = SiLU( y @ W1b + b1b ) @ W2b + b2b
# ----------------------------------------------------------------------------
def _mlp_kernel(*refs, n_parts, use_ln, has_res, has_stage2):
    # ref order: x_parts..., [res], w1_parts..., b1, w2, b2,
    #            [gamma, beta], [w1b, b1b, w2b, b2b], out
    k = 0
    x_refs = refs[k:k + n_parts]
    k += n_parts
    res_ref = None
    if has_res:
        res_ref = refs[k]
        k += 1
    w1_refs = refs[k:k + n_parts]
    k += n_parts
    b1_ref, w2_ref, b2_ref = refs[k], refs[k + 1], refs[k + 2]
    k += 3
    if use_ln:
        gamma_ref, beta_ref = refs[k], refs[k + 1]
        k += 2
    if has_stage2:
        w1b_ref, b1b_ref, w2b_ref, b2b_ref = refs[k:k + 4]
        k += 4
    o_ref = refs[k]

    # Linear 1: split-K over the logically-concatenated input, bf16 MXU, f32 acc.
    h = b1_ref[...]
    for xr, wr in zip(x_refs, w1_refs):
        h = h + jnp.dot(xr[...].astype(jnp.bfloat16), wr[...],
                        preferred_element_type=jnp.float32)
    # SiLU in f32 (v5e VPU/EUP have no bf16 path).
    h = h * jax.nn.sigmoid(h)
    y = jnp.dot(h.astype(jnp.bfloat16), w2_ref[...],
                preferred_element_type=jnp.float32) + b2_ref[...]
    if use_ln:  # LayerNorm, eps = 1e-5 (torch default), f32 math
        mu = jnp.mean(y, axis=-1, keepdims=True)
        var = jnp.mean(jnp.square(y - mu), axis=-1, keepdims=True)
        y = (y - mu) * jax.lax.rsqrt(var + 1e-5)
        y = y * gamma_ref[...] + beta_ref[...]
    if has_res:  # fused residual (residual may arrive as bf16)
        y = res_ref[...].astype(jnp.float32) + y
    if has_stage2:  # fused second MLP (e.g. decoder output head)
        h2 = jnp.dot(y.astype(jnp.bfloat16), w1b_ref[...],
                     preferred_element_type=jnp.float32) + b1b_ref[...]
        h2 = h2 * jax.nn.sigmoid(h2)
        y = jnp.dot(h2.astype(jnp.bfloat16), w2b_ref[...],
                    preferred_element_type=jnp.float32) + b2b_ref[...]
    o_ref[...] = y.astype(o_ref.dtype)


def _fused_mlp(parts, params, use_ln, residual=None, params2=None,
               out_dtype=jnp.bfloat16):
    """Fused Linear->SiLU->Linear[->LN][+res][->Linear->SiLU->Linear].

    parts    : list of (array, batched) — array is [rows, d_k] (shared across
               batch) or [B, rows, d_k] (per-batch).
    residual : optional (array, batched) with feature dim == stage-1 d_out.
    params2  : optional second MLP (w1b, b1b, w2b, b2b) fused on the output
               tile while it is still resident in VMEM.
    Returns [B, rows, d_final] if anything is batched, else [rows, d_final].
    """
    w1_blocks, b1, w2, b2, gamma, beta = params
    assert len(w1_blocks) == len(parts)

    batched_any = any(bt for _, bt in parts) or (residual is not None and residual[1])
    rows = parts[0][0].shape[-2]
    B = 1
    for a, bt in parts:
        assert a.shape[-2] == rows
        if bt:
            B = a.shape[0]
    if residual is not None and residual[1]:
        B = residual[0].shape[0]

    tm = _choose_tm(rows)
    n_tiles = pl.cdiv(rows, tm)   # ragged last block handled by Pallas

    hidden = w2.shape[0]
    d_out = w2.shape[1]
    if params2 is not None:
        w1b, b1b, w2b, b2b = params2
        d_final = w2b.shape[1]
    else:
        d_final = d_out

    in_arrays, in_specs = [], []
    for a, bt in parts:
        d = a.shape[-1]
        in_arrays.append(a)
        if bt:
            in_specs.append(pl.BlockSpec((None, tm, d), lambda i, bi: (bi, i, 0)))
        else:
            # batch-invariant part: same block index across the (innermost)
            # batch axis -> DMA skipped on consecutive grid steps.
            in_specs.append(pl.BlockSpec((tm, d), lambda i, bi: (i, 0)))

    has_res = residual is not None
    if has_res:
        ra, rbt = residual
        in_arrays.append(ra)
        if rbt:
            in_specs.append(pl.BlockSpec((None, tm, d_out), lambda i, bi: (bi, i, 0)))
        else:
            in_specs.append(pl.BlockSpec((tm, d_out), lambda i, bi: (i, 0)))

    def _full(arr):   # whole-array (weight / bias) block, index constant
        in_arrays.append(arr)
        in_specs.append(pl.BlockSpec(arr.shape, lambda i, bi, _n=arr.ndim: (0,) * _n))

    for wb in w1_blocks:
        _full(wb)
    _full(b1); _full(w2); _full(b2)
    if use_ln:
        _full(gamma); _full(beta)
    if params2 is not None:
        _full(w1b); _full(b1b); _full(w2b); _full(b2b)

    out = pl.pallas_call(
        functools.partial(_mlp_kernel, n_parts=len(parts), use_ln=use_ln,
                          has_res=has_res, has_stage2=params2 is not None),
        out_shape=jax.ShapeDtypeStruct((B, rows, d_final), out_dtype),
        grid=(n_tiles, B),                      # batch innermost (reuse DMAs)
        in_specs=in_specs,
        out_specs=pl.BlockSpec((None, tm, d_final), lambda i, bi: (bi, i, 0)),
        compiler_params=pltpu.CompilerParams(
            dimension_semantics=("parallel", "arbitrary"),
            vmem_limit_bytes=_VMEM_LIMIT),
    )(*in_arrays)

    if not batched_any:
        out = out[0]
    return out


# ----------------------------------------------------------------------------
# Deterministic graph construction (numpy, precomputed buffers)
# ----------------------------------------------------------------------------
def _icosahedron():
    phi = (1.0 + np.sqrt(5.0)) / 2.0
    verts = np.array(
        [[-1, phi, 0], [1, phi, 0], [-1, -phi, 0], [1, -phi, 0],
         [0, -1, phi], [0, 1, phi], [0, -1, -phi], [0, 1, -phi],
         [phi, 0, -1], [phi, 0, 1], [-phi, 0, -1], [-phi, 0, 1]],
        dtype=np.float64)
    verts /= np.linalg.norm(verts, axis=1, keepdims=True)
    faces = np.array(
        [[0, 11, 5], [0, 5, 1], [0, 1, 7], [0, 7, 10], [0, 10, 11],
         [1, 5, 9], [5, 11, 4], [11, 10, 2], [10, 7, 6], [7, 1, 8],
         [3, 9, 4], [3, 4, 2], [3, 2, 6], [3, 6, 8], [3, 8, 9],
         [4, 9, 5], [2, 4, 11], [6, 2, 10], [8, 6, 7], [9, 8, 1]],
        dtype=np.int64)
    return verts, faces


def _subdivide(verts, faces):
    verts = [v for v in verts]
    cache = {}

    def midpoint(a, b):
        key = (min(a, b), max(a, b))
        if key not in cache:
            v = verts[a] + verts[b]
            v = v / np.linalg.norm(v)
            verts.append(v)
            cache[key] = len(verts) - 1
        return cache[key]

    new_faces = []
    for a, b, c in faces:
        ab, bc, ca = midpoint(a, b), midpoint(b, c), midpoint(c, a)
        new_faces += [[a, ab, ca], [b, bc, ab], [c, ca, bc], [ab, bc, ca]]
    return np.stack(verts), np.array(new_faces, dtype=np.int64)


def _faces_to_edges(faces):
    senders = np.concatenate([faces[:, 0], faces[:, 1], faces[:, 2]])
    receivers = np.concatenate([faces[:, 1], faces[:, 2], faces[:, 0]])
    return senders, receivers


def _cart_to_lat_lon_deg(xyz):
    lat = np.degrees(np.arcsin(np.clip(xyz[:, 2], -1.0, 1.0)))
    lon = np.degrees(np.arctan2(xyz[:, 1], xyz[:, 0]))
    return lat.astype(np.float32), lon.astype(np.float32)


def _lat_lon_deg_to_cart(lat, lon):
    la, lo = np.radians(lat), np.radians(lon)
    return np.stack([np.cos(la) * np.cos(lo),
                     np.cos(la) * np.sin(lo),
                     np.sin(la)], axis=-1)


def _node_geo_features(lat, lon):
    # cos(latitude), sin(longitude), cos(longitude)  -> 3 features per node
    la, lo = np.radians(lat), np.radians(lon)
    return np.stack([np.cos(la), np.sin(lo), np.cos(lo)], axis=-1).astype(np.float32)


def _edge_geo_features(sender_lat, sender_lon, recv_lat, recv_lon, senders, receivers):
    # [edge length, relative 3D position in receiver-local frame] -> 4 features
    sp = _lat_lon_deg_to_cart(sender_lat, sender_lon)[senders]
    rp = _lat_lon_deg_to_cart(recv_lat, recv_lon)[receivers]
    rlat = np.radians(recv_lat[receivers])
    rlon = np.radians(recv_lon[receivers])
    d = sp - rp
    c1, s1 = np.cos(-rlon), np.sin(-rlon)
    x1 = c1 * d[:, 0] - s1 * d[:, 1]
    y1 = s1 * d[:, 0] + c1 * d[:, 1]
    z1 = d[:, 2]
    c2, s2 = np.cos(rlat), np.sin(rlat)
    x2 = c2 * x1 + s2 * z1
    z2 = -s2 * x1 + c2 * z1
    rel = np.stack([x2, y1, z2], axis=-1)
    length = np.linalg.norm(rel, axis=-1, keepdims=True)
    norm = max(float(length.max()), 1e-12)          # edge_normalization_factor=None
    feats = np.concatenate([length / norm, rel / norm], axis=-1)
    return feats.astype(np.float32)


# ----------------------------------------------------------------------------
# Parameters (W1 pre-split per input part; matmul weights stored in bf16)
# ----------------------------------------------------------------------------
def _init_mlp(key, d_ins, hidden, d_out, d_out_pad=None):
    d_in = int(sum(d_ins))
    k1, k2 = jax.random.split(key)
    w1 = jax.random.normal(k1, (d_in, hidden), jnp.float32) / np.sqrt(d_in)
    w2 = jax.random.normal(k2, (hidden, d_out), jnp.float32) / np.sqrt(hidden)
    if d_out_pad is not None and d_out_pad > d_out:
        # zero-pad output columns so stores are lane-dense; sliced off outside.
        w2 = jnp.pad(w2, ((0, 0), (0, d_out_pad - d_out)))
        d_out = d_out_pad
    blocks = []
    start = 0
    for d in d_ins:
        blocks.append(w1[start:start + d].astype(jnp.bfloat16))
        start += d
    return (tuple(blocks),
            jnp.zeros((1, hidden), jnp.float32),
            w2.astype(jnp.bfloat16),
            jnp.zeros((1, d_out), jnp.float32),
            jnp.ones((1, d_out), jnp.float32),
            jnp.zeros((1, d_out), jnp.float32))


# ----------------------------------------------------------------------------
# GraphCast model
# ----------------------------------------------------------------------------
class GraphCastPallas:
    def __init__(self, latitudes, longitudes, in_dim, out_dim, mesh_size=1,
                 latent_size=128, nround_mp=2,
                 radius_query_fraction_edge_length=0.6, seed=42):
        self.n_lat = len(latitudes)
        self.n_lon = len(longitudes)
        self.n_grid = self.n_lat * self.n_lon
        self.latent = latent_size
        self.nround_mp = nround_mp
        self.out_dim = out_dim
        self.out_pad = _round_up(out_dim, 128)   # lane-dense final store

        # --- mesh hierarchy (GraphBase._init_meshes) ---
        verts, faces = _icosahedron()
        meshes = [(verts, faces)]
        for _ in range(mesh_size):
            verts, faces = _subdivide(verts, faces)
            meshes.append((verts, faces))
        fin_v, fin_f = meshes[-1]
        self.n_mesh = fin_v.shape[0]
        mesh_lat, mesh_lon = _cart_to_lat_lon_deg(fin_v)

        # --- grid (GraphBase._init_grids) ---
        # NOTE: meshgrid 'xy' flatten order replicated exactly as in the
        # reference code (it differs from the lat-major order used in forward).
        glat, glon = np.meshgrid(np.asarray(latitudes), np.asarray(longitudes))
        grid_lat = glat.flatten().astype(np.float32)
        grid_lon = glon.flatten().astype(np.float32)

        # query radius = max finest-mesh edge chord length * fraction
        s, r = _faces_to_edges(fin_f)
        max_edge = np.linalg.norm(fin_v[s] - fin_v[r], axis=-1).max()
        radius = max_edge * radius_query_fraction_edge_length

        # --- grid2mesh graph (radius query) ---
        grid_pos = _lat_lon_deg_to_cart(grid_lat, grid_lon)
        dist = np.linalg.norm(grid_pos[:, None, :] - fin_v[None, :, :], axis=-1)
        g_idx, m_idx = np.nonzero(dist <= radius)
        self.g2m_senders = jnp.asarray(g_idx, jnp.int32)
        self.g2m_receivers = jnp.asarray(m_idx, jnp.int32)
        self.g2m_edge_feat = jnp.asarray(
            _edge_geo_features(grid_lat, grid_lon, mesh_lat, mesh_lon, g_idx, m_idx))
        self.grid_geo = jnp.asarray(_node_geo_features(grid_lat, grid_lon))
        self.mesh_geo = jnp.asarray(_node_geo_features(mesh_lat, mesh_lon))

        # --- mesh2mesh graph (merged multi-level meshes) ---
        merged_faces = np.concatenate([f for _, f in meshes], axis=0)
        ms, mr = _faces_to_edges(merged_faces)
        self.m2m_senders = jnp.asarray(ms, jnp.int32)
        self.m2m_receivers = jnp.asarray(mr, jnp.int32)
        self.m2m_edge_feat = jnp.asarray(
            _edge_geo_features(mesh_lat, mesh_lon, mesh_lat, mesh_lon, ms, mr))

        # --- mesh2grid graph ---
        # TODO(synk): exact point-in-spherical-triangle query replaced by
        # nearest-face-centroid (mesh_grid.in_mesh_triangle_indices unavailable).
        centroids = fin_v[fin_f].mean(axis=1)
        centroids /= np.linalg.norm(centroids, axis=-1, keepdims=True)
        nearest_face = np.argmin(
            np.linalg.norm(grid_pos[:, None, :] - centroids[None, :, :], axis=-1),
            axis=-1)
        d_m = fin_f[nearest_face].reshape(-1)           # mesh senders
        d_g = np.repeat(np.arange(self.n_grid), 3)      # grid receivers
        self.m2g_senders = jnp.asarray(d_m, jnp.int32)
        self.m2g_receivers = jnp.asarray(d_g, jnp.int32)
        self.m2g_edge_feat = jnp.asarray(
            _edge_geo_features(mesh_lat, mesh_lon, grid_lat, grid_lon, d_m, d_g))

        # --- deterministic parameter init ---
        H = latent_size
        names_dims = [
            ("enc_grid_embed", [in_dim + 3], H),   # grid feats ++ geo feats
            ("enc_mesh_embed", [3], H),
            ("enc_edge_embed", [4], H),
            ("enc_edge_mlp", [H, H, H], H),
            ("enc_mesh_mlp", [H, H], H),
            ("enc_grid_mlp", [H], H),
            ("proc_edge_embed", [4], H),
        ]
        for i in range(nround_mp):
            names_dims += [(f"proc_edge_mlp_{i}", [H, H, H], H),
                           (f"proc_node_mlp_{i}", [H, H], H)]
        names_dims += [
            ("dec_edge_embed", [4], H),
            ("dec_edge_mlp", [H, H, H], H),
            ("dec_node_mlp", [H, H], H),
        ]
        keys = jax.random.split(jax.random.PRNGKey(seed), len(names_dims) + 1)
        self.params = {name: _init_mlp(k, dins, H, dout)
                       for k, (name, dins, dout) in zip(keys[:-1], names_dims)}
        # decoder output head (fused as stage-2 of dec_node_mlp), lane-padded
        ob, o_b1, o_w2, o_b2, _, _ = _init_mlp(keys[-1], [H], H, out_dim,
                                               d_out_pad=self.out_pad)
        self.params["dec_output2"] = (ob[0], o_b1, o_w2, o_b2)

        # --- batch-invariant latents hoisted out of forward() (bf16) ---
        p = self.params
        self.mesh_lat0 = _fused_mlp([(self.mesh_geo, False)],
                                    p["enc_mesh_embed"], True)        # [M, H]
        self.g2m_e0 = _fused_mlp([(self.g2m_edge_feat, False)],
                                 p["enc_edge_embed"], True)           # [Eg, H]
        self.m2m_e0 = _fused_mlp([(self.m2m_edge_feat, False)],
                                 p["proc_edge_embed"], True)          # [Em, H]
        self.m2g_e0 = _fused_mlp([(self.m2g_edge_feat, False)],
                                 p["dec_edge_embed"], False)          # [Ed, H]
        # receiver-side mesh latents for g2m edges are also batch-invariant
        self.g2m_recv_mesh = self.mesh_lat0[self.g2m_receivers]       # [Eg, H]

    # --------------------------------------------------------------------
    def forward(self, x):
        """x: [b, in_dim, n_lat, n_lon] (NCHW) -> [b, out_dim, n_lat, n_lon]."""
        p = self.params
        b = x.shape[0]
        H = self.latent

        # b c lat lon -> b lat lon c -> b (lat*lon) c, then append geo feats
        g_in = jnp.transpose(x, (0, 2, 3, 1)).reshape(b, self.n_grid, -1)
        geo = jnp.broadcast_to(self.grid_geo[None], (b, self.n_grid, 3))
        g_in = jnp.concatenate([g_in, geo], axis=-1)        # [b, G, in_dim+3]

        # ---------------- Grid2Mesh encoder ----------------
        g_lat0 = _fused_mlp([(g_in, True)], p["enc_grid_embed"], True)   # [b,G,H]
        s, r = self.g2m_senders, self.g2m_receivers
        # TODO(synk): fuse gather + sorted segment-sum into the Pallas kernel
        # (scalar-prefetched receiver offsets) in a follow-up; gathered slabs
        # are bf16 so the HBM materialization is already half-width.
        e_lat = _fused_mlp([(self.g2m_e0, False),
                            (g_lat0[:, s], True),
                            (self.g2m_recv_mesh, False)],
                           p["enc_edge_mlp"], True,
                           residual=(self.g2m_e0, False))              # [b, Eg, H]
        agg = jnp.zeros((b, self.n_mesh, H), jnp.float32).at[:, r].add(
            e_lat.astype(jnp.float32))                                 # f32 accum
        m_lat = _fused_mlp([(self.mesh_lat0, False), (agg, True)],
                           p["enc_mesh_mlp"], True,
                           residual=(self.mesh_lat0, False))           # [b, M, H]
        g_lat = _fused_mlp([(g_lat0, True)], p["enc_grid_mlp"], True,
                           residual=(g_lat0, True))

        # ---------------- Mesh processor (nround_mp rounds) ----------------
        ps, pr = self.m2m_senders, self.m2m_receivers
        pe_lat, pe_batched = self.m2m_e0, False
        for i in range(self.nround_mp):
            pe_new = _fused_mlp(
                [(pe_lat, pe_batched), (m_lat[:, ps], True), (m_lat[:, pr], True)],
                p[f"proc_edge_mlp_{i}"], True, residual=(pe_lat, pe_batched))
            pe_lat, pe_batched = pe_new, True
            agg = jnp.zeros((b, self.n_mesh, H), jnp.float32).at[:, pr].add(
                pe_lat.astype(jnp.float32))
            m_lat = _fused_mlp([(m_lat, True), (agg, True)],
                               p[f"proc_node_mlp_{i}"], True,
                               residual=(m_lat, True))

        # ---------------- Mesh2Grid decoder (no layer norm) ----------------
        ds, dr = self.m2g_senders, self.m2g_receivers
        de_lat = _fused_mlp([(self.m2g_e0, False),
                             (m_lat[:, ds], True),
                             (g_lat[:, dr], True)],
                            p["dec_edge_mlp"], False,
                            residual=(self.m2g_e0, False))             # [b, Ed, H]
        agg = jnp.zeros((b, self.n_grid, H), jnp.float32).at[:, dr].add(
            de_lat.astype(jnp.float32))
        # dec_node_mlp + dec_output fused into one kernel (stage-2 MLP),
        # final store is lane-dense (out_pad columns), sliced below.
        out = _fused_mlp([(g_lat, True), (agg, True)],
                         p["dec_node_mlp"], False, residual=(g_lat, True),
                         params2=p["dec_output2"],
                         out_dtype=jnp.float32)                        # [b, G, out_pad]
        out = out[..., :self.out_dim]

        # restore_shape: [b, lat*lon, c] -> [b, lat, lon, c] -> [b, c, lat, lon]
        out = out.reshape(b, self.n_lat, self.n_lon, self.out_dim)
        return jnp.transpose(out, (0, 3, 1, 2))


# ----------------------------------------------------------------------------
if __name__ == "__main__":
    n_lat, n_lon = 8, 16
    latitudes = np.linspace(-75.0, 75.0, n_lat)
    longitudes = np.linspace(0.0, 360.0, n_lon, endpoint=False)
    in_dim, out_dim = 8, 8

    # latent_size=128 keeps the hidden/latent tiles lane-dense (128-wide).
    model = GraphCastPallas(latitudes, longitudes, in_dim=in_dim, out_dim=out_dim,
                            mesh_size=1, latent_size=128, nround_mp=2)

    key = jax.random.PRNGKey(0)
    x = jax.random.normal(key, (2, in_dim, n_lat, n_lon), jnp.float32)

    fwd = jax.jit(model.forward)
    out = jax.block_until_ready(fwd(x))

    assert out.shape == (2, out_dim, n_lat, n_lon), out.shape
    assert bool(jnp.isfinite(out).all())
    print("KERNEL_OK")
</pallas_src>

<mosaic_0001>
module attributes {stable_mosaic.version = 11 : i64} {
  func.func @_mlp_kernel(%arg0: i32, %arg1: i32, %arg2: memref<48x3xf32, #tpu.memory_space<vmem>>, %arg3: memref<3x128xbf16, #tpu.memory_space<vmem>>, %arg4: memref<1x128xf32, #tpu.memory_space<vmem>>, %arg5: memref<128x128xbf16, #tpu.memory_space<vmem>>, %arg6: memref<1x128xf32, #tpu.memory_space<vmem>>, %arg7: memref<1x128xf32, #tpu.memory_space<vmem>>, %arg8: memref<1x128xf32, #tpu.memory_space<vmem>>, %arg9: memref<1x48x128xbf16, #tpu.memory_space<vmem>>) attributes {dimension_semantics = [#tpu.dimension_semantics<parallel>, #tpu.dimension_semantics<arbitrary>], iteration_bounds = array<i64: 1, 1>, scalar_prefetch = 0 : i64, scratch_operands = 0 : i64, tpu.core_type = #tpu.core_type<tc>, window_params = [{transform_indices = @transform_0, window_bounds = array<i64: 48, 3>}, {pipeline_mode = #tpu.pipeline_mode<synchronous>, transform_indices = @transform_1, window_bounds = array<i64: 3, 128>}, {pipeline_mode = #tpu.pipeline_mode<synchronous>, transform_indices = @transform_2, window_bounds = array<i64: 1, 128>}, {pipeline_mode = #tpu.pipeline_mode<synchronous>, transform_indices = @transform_3, window_bounds = array<i64: 128, 128>}, {pipeline_mode = #tpu.pipeline_mode<synchronous>, transform_indices = @transform_4, window_bounds = array<i64: 1, 128>}, {pipeline_mode = #tpu.pipeline_mode<synchronous>, transform_indices = @transform_5, window_bounds = array<i64: 1, 128>}, {pipeline_mode = #tpu.pipeline_mode<synchronous>, transform_indices = @transform_6, window_bounds = array<i64: 1, 128>}, {transform_indices = @transform_7, window_bounds = array<i64: 1, 48, 128>}]} {
    %c0 = arith.constant 0 : index
    %c0_0 = arith.constant 0 : index
    %0 = vector.load %arg4[%c0, %c0_0] : memref<1x128xf32, #tpu.memory_space<vmem>>, vector<1x128xf32>
    %c0_1 = arith.constant 0 : index
    %c0_2 = arith.constant 0 : index
    %1 = vector.load %arg2[%c0_1, %c0_2] : memref<48x3xf32, #tpu.memory_space<vmem>>, vector<48x3xf32>
    %2 = arith.truncf %1 : vector<48x3xf32> to vector<48x3xbf16>
    %c0_3 = arith.constant 0 : index
    %c0_4 = arith.constant 0 : index
    %3 = vector.load %arg3[%c0_3, %c0_4] : memref<3x128xbf16, #tpu.memory_space<vmem>>, vector<3x128xbf16>
    %cst = arith.constant dense<0.000000e+00> : vector<48x128xf32>
    %4 = tpu.matmul %2, %3, %cst {dimension_numbers = #tpu.dot_dimension_numbers<[1], [0], [0], [1], [0, 0, 1, 1], [], []>} : vector<48x3xbf16>, vector<3x128xbf16>, vector<48x128xf32> -> vector<48x128xf32>
    %5 = vector.broadcast %0 : vector<1x128xf32> to vector<48x128xf32>
    %6 = arith.addf %5, %4 : vector<48x128xf32>
    %7 = arith.negf %6 : vector<48x128xf32>
    %8 = math.exp %7 : vector<48x128xf32>
    %cst_5 = arith.constant 1.000000e+00 : f32
    %9 = vector.broadcast %cst_5 : f32 to vector<48x128xf32>
    %10 = arith.addf %9, %8 : vector<48x128xf32>
    %11 = arith.divf %9, %10 : vector<48x128xf32>
    %12 = arith.mulf %6, %11 : vector<48x128xf32>
    %13 = arith.truncf %12 : vector<48x128xf32> to vector<48x128xbf16>
    %c0_6 = arith.constant 0 : index
    %c0_7 = arith.constant 0 : index
    %14 = vector.load %arg5[%c0_6, %c0_7] : memref<128x128xbf16, #tpu.memory_space<vmem>>, vector<128x128xbf16>
    %cst_8 = arith.constant dense<0.000000e+00> : vector<48x128xf32>
    %15 = tpu.matmul %13, %14, %cst_8 {dimension_numbers = #tpu.dot_dimension_numbers<[1], [0], [0], [1], [0, 0, 1, 1], [], []>} : vector<48x128xbf16>, vector<128x128xbf16>, vector<48x128xf32> -> vector<48x128xf32>
    %c0_9 = arith.constant 0 : index
    %c0_10 = arith.constant 0 : index
    %16 = vector.load %arg6[%c0_9, %c0_10] : memref<1x128xf32, #tpu.memory_space<vmem>>, vector<1x128xf32>
    %17 = vector.broadcast %16 : vector<1x128xf32> to vector<48x128xf32>
    %18 = arith.addf %15, %17 : vector<48x128xf32>
    %cst_11 = arith.constant dense<0.000000e+00> : vector<48xf32>
    %19 = vector.multi_reduction <add>, %18, %cst_11 [1] : vector<48x128xf32> to vector<48xf32>
    %20 = vector.shape_cast %19 : vector<48xf32> to vector<48x1xf32>
    %cst_12 = arith.constant 1.280000e+02 : f32
    %21 = vector.broadcast %cst_12 : f32 to vector<48x1xf32>
    %22 = arith.divf %20, %21 : vector<48x1xf32>
    %23 = vector.broadcast %22 : vector<48x1xf32> to vector<48x128xf32>
    %24 = arith.subf %18, %23 : vector<48x128xf32>
    %25 = arith.mulf %24, %24 : vector<48x128xf32>
    %cst_13 = arith.constant dense<0.000000e+00> : vector<48xf32>
    %26 = vector.multi_reduction <add>, %25, %cst_13 [1] : vector<48x128xf32> to vector<48xf32>
    %27 = vector.shape_cast %26 : vector<48xf32> to vector<48x1xf32>
    %cst_14 = arith.constant 1.280000e+02 : f32
    %28 = vector.broadcast %cst_14 : f32 to vector<48x1xf32>
    %29 = arith.divf %27, %28 : vector<48x1xf32>
    %30 = vector.broadcast %22 : vector<48x1xf32> to vector<48x128xf32>
    %31 = arith.subf %18, %30 : vector<48x128xf32>
    %cst_15 = arith.constant 9.99999974E-6 : f32
    %32 = vector.broadcast %cst_15 : f32 to vector<48x1xf32>
    %33 = arith.addf %29, %32 : vector<48x1xf32>
    %34 = math.rsqrt %33 : vector<48x1xf32>
    %35 = vector.broadcast %34 : vector<48x1xf32> to vector<48x128xf32>
    %36 = arith.mulf %31, %35 : vector<48x128xf32>
    %c0_16 = arith.constant 0 : index
    %c0_17 = arith.constant 0 : index
    %37 = vector.load %arg7[%c0_16, %c0_17] : memref<1x128xf32, #tpu.memory_space<vmem>>, vector<1x128xf32>
    %38 = vector.broadcast %37 : vector<1x128xf32> to vector<48x128xf32>
    %39 = arith.mulf %36, %38 : vector<48x128xf32>
    %c0_18 = arith.constant 0 : index
    %c0_19 = arith.constant 0 : index
    %40 = vector.load %arg8[%c0_18, %c0_19] : memref<1x128xf32, #tpu.memory_space<vmem>>, vector<1x128xf32>
    %41 = vector.broadcast %40 : vector<1x128xf32> to vector<48x128xf32>
    %42 = arith.addf %39, %41 : vector<48x128xf32>
    %43 = arith.truncf %42 : vector<48x128xf32> to vector<48x128xbf16>
    %c0_20 = arith.constant 0 : index
    %c0_21 = arith.constant 0 : index
    %c0_22 = arith.constant 0 : index
    %44 = vector.load %arg9[%c0_20, %c0_21, %c0_22] : memref<1x48x128xbf16, #tpu.memory_space<vmem>>, vector<1x48x128xbf16>
    %45 = vector.shape_cast %44 : vector<1x48x128xbf16> to vector<48x128xbf16>
    %46 = vector.shape_cast %43 : vector<48x128xbf16> to vector<1x48x128xbf16>
    tpu.vector_store %arg9[%c0_20, %c0_21, %c0_22], %46 {strides = array<i32>} : memref<1x48x128xbf16, #tpu.memory_space<vmem>>, vector<1x48x128xbf16>,
    return
  }
  func.func @transform_0(%arg0: i32, %arg1: i32) -> (i32, i32) {
    %c0_i32 = arith.constant 0 : i32
    %c0_i32_0 = arith.constant 0 : i32
    return %arg0, %c0_i32 : i32, i32
  }
  func.func @transform_1(%arg0: i32, %arg1: i32) -> (i32, i32) {
    %c0_i32 = arith.constant 0 : i32
    %c0_i32_0 = arith.constant 0 : i32
    %c0_i32_1 = arith.constant 0 : i32
    return %c0_i32, %c0_i32_0 : i32, i32
  }
  func.func @transform_2(%arg0: i32, %arg1: i32) -> (i32, i32) {
    %c0_i32 = arith.constant 0 : i32
    %c0_i32_0 = arith.constant 0 : i32
    %c0_i32_1 = arith.constant 0 : i32
    return %c0_i32, %c0_i32_0 : i32, i32
  }
  func.func @transform_3(%arg0: i32, %arg1: i32) -> (i32, i32) {
    %c0_i32 = arith.constant 0 : i32
    %c0_i32_0 = arith.constant 0 : i32
    %c0_i32_1 = arith.constant 0 : i32
    return %c0_i32, %c0_i32_0 : i32, i32
  }
  func.func @transform_4(%arg0: i32, %arg1: i32) -> (i32, i32) {
    %c0_i32 = arith.constant 0 : i32
    %c0_i32_0 = arith.constant 0 : i32
    %c0_i32_1 = arith.constant 0 : i32
    return %c0_i32, %c0_i32_0 : i32, i32
  }
  func.func @transform_5(%arg0: i32, %arg1: i32) -> (i32, i32) {
    %c0_i32 = arith.constant 0 : i32
    %c0_i32_0 = arith.constant 0 : i32
    %c0_i32_1 = arith.constant 0 : i32
    return %c0_i32, %c0_i32_0 : i32, i32
  }
  func.func @transform_6(%arg0: i32, %arg1: i32) -> (i32, i32) {
    %c0_i32 = arith.constant 0 : i32
    %c0_i32_0 = arith.constant 0 : i32
    %c0_i32_1 = arith.constant 0 : i32
    return %c0_i32, %c0_i32_0 : i32, i32
  }
  func.func @transform_7(%arg0: i32, %arg1: i32) -> (i32, i32, i32) {
    %c0_i32 = arith.constant 0 : i32
    %c0_i32_0 = arith.constant 0 : i32
    return %arg1, %arg0, %c0_i32 : i32, i32, i32
  }
}

</mosaic_0001>

<llo_original>
// kernel: tpu_custom_call.1
$region0: #{tpu_custom_call.1}
  #allocation0 [shape = 'u32[]', space=smem, size = 0x4, offset = 0x4, fixed_abs, tag = 'smem constant byte address 0x4 - core index']
  #allocation1 [shape = 'u32[72,128]{1,0:T(1,128)}', space=vmem, size = 0x9000, scoped, tag = 'internal scratch']
  %s0 = inlined_call_operand.vmem [shape: f32[42,3], index: 0, kind: input, shape index: {}]
  %s1 = inlined_call_operand.vmem [shape: bf16[3,128], index: 1, kind: input, shape index: {}]
  %s2 = inlined_call_operand.vmem [shape: f32[1,128], index: 2, kind: input, shape index: {}]
  %s3 = inlined_call_operand.hbm [shape: bf16[128,128], index: 3, kind: input, shape index: {}]
  %s4 = inlined_call_operand.vmem [shape: f32[1,128], index: 4, kind: input, shape index: {}]
  %s5 = inlined_call_operand.vmem [shape: f32[1,128], index: 5, kind: input, shape index: {}]
  %s6 = inlined_call_operand.vmem [shape: f32[1,128], index: 6, kind: input, shape index: {}]
  %s7 = inlined_call_operand.hbm [shape: bf16[1,42,128], index: 7, kind: output, shape index: {}]
  %s8 = sld [smem:[#allocation0]]
  $region42: #{tpu_custom_call.1} parent=0
    _
  %s10 = ssub.s32 1, %s8
  %s11 = scalar_select 0, %s10, %s8
  $region1: #{tpu_custom_call.1} parent=0
    #allocation2 [shape = 'u8[32768]{0}', space=vmem, size = 0x8000, scoped, tag = 'input window, operand 3, single buffered']
    #allocation3 [shape = 's32[1]{0}', space=sflag, size = 0x4, scoped, tag = 'scoped memory for tpu_custom_call.1']
    #allocation4 [shape = 's32[1]{0}', space=sflag, size = 0x4, scoped, tag = 'scoped memory for tpu_custom_call.1']
    #allocation5 [shape = 'u8[12288]{0}', space=vmem, size = 0x3000, scoped, tag = 'output window, operand 0, single buffered']
    %12 = vsyncpa [#allocation3], 0
    %13 = vsyncpa [#allocation4], 0
    // Predicated region
    $region2: #{tpu_custom_call.1} parent=1 // pred_check
      _
    $region3: #{tpu_custom_call.1} parent=1 // pred_check_branch
      %15 = sbr.rel (0) target = $region5
    $region4: #{tpu_custom_call.1} parent=1 // pred_region
      _
    $region5: #{tpu_custom_call.1} parent=1 // pred_fallthru
      _
    // Predicated region
    $region6: #{tpu_custom_call.1} parent=1 // pred_check
      _
    $region7: #{tpu_custom_call.1} parent=1 // pred_check_branch
      %17 = sbr.rel (0) target = $region9
    $region8: #{tpu_custom_call.1} parent=1 // pred_region
      _
    $region9: #{tpu_custom_call.1} parent=1 // pred_fallthru
      _
    // Predicated region
    $region10: #{tpu_custom_call.1} parent=1 // pred_check
      _
    $region11: #{tpu_custom_call.1} parent=1 // pred_check_branch
      %19 = sbr.rel (0) target = $region13
    $region12: #{tpu_custom_call.1} parent=1 // pred_region
      _
    $region13: #{tpu_custom_call.1} parent=1 // pred_fallthru
      _
    // Predicated region
    $region14: #{tpu_custom_call.1} parent=1 // pred_check
      _
    $region15: #{tpu_custom_call.1} parent=1 // pred_check_branch
      %21 = sbr.rel (0) target = $region17
    $region16: #{tpu_custom_call.1} parent=1 // pred_region
      %23 = vsyncadd [#allocation3], 0
      %s24 = sshll.u32 %s3, 4
      %s25 = int_to_ptr.hbm [resolvable:$true] %s24
      %s26 = sshll.u32 [#allocation2], 4
      %s27 = int_to_ptr.vmem [resolvable:$true] %s26
      %32 = dma.hbm_to_vmem [thread:$0]  %s25, 1024, %s27, [#allocation3], 64, 64, 4
    $region17: #{tpu_custom_call.1} parent=1 // pred_fallthru
      _
    // Predicated region
    $region18: #{tpu_custom_call.1} parent=1 // pred_check
      _
    $region19: #{tpu_custom_call.1} parent=1 // pred_check_branch
      %34 = sbr.rel (0) target = $region21
    $region20: #{tpu_custom_call.1} parent=1 // pred_region
      _
    $region21: #{tpu_custom_call.1} parent=1 // pred_fallthru
      _
    // Predicated region
    $region22: #{tpu_custom_call.1} parent=1 // pred_check
      _
    $region23: #{tpu_custom_call.1} parent=1 // pred_check_branch
      %36 = sbr.rel (0) target = $region25
    $region24: #{tpu_custom_call.1} parent=1 // pred_region
      _
    $region25: #{tpu_custom_call.1} parent=1 // pred_fallthru
      _
    // Predicated region
    $region26: #{tpu_custom_call.1} parent=1 // pred_check
      _
    $region27: #{tpu_custom_call.1} parent=1 // pred_check_branch
      %38 = sbr.rel (0) target = $region29
    $region28: #{tpu_custom_call.1} parent=1 // pred_region
      _
    $region29: #{tpu_custom_call.1} parent=1 // pred_fallthru
      _
    // Predicated region
    $region30: #{tpu_custom_call.1} parent=1 // pred_check
      _
    $region31: #{tpu_custom_call.1} parent=1 // pred_check_branch
      %40 = sbr.rel (0) target = $region33
    $region32: #{tpu_custom_call.1} parent=1 // pred_region
      %42 = dma.done [#allocation3], 1024
    $region33: #{tpu_custom_call.1} parent=1 // pred_fallthru
      _
    %v44 = vld [vmem:[%s2] sm:$0x1]
    %v45 = vld [vmem:[%s0] sm:$0xff]
    %v46 = vld [vmem:[%s0 + $0x8] sm:$0xff]
    %v47 = vld [vmem:[%s0 + $0x10] sm:$0xff]
    %v48 = vld [vmem:[%s0 + $0x18] sm:$0xff]
    %v49 = vld [vmem:[%s0 + $0x20] sm:$0xff]
    %v50 = vld [vmem:[%s0 + $0x28] sm:$0xff]
    %v51 = vpack.c.bf16 %v46, %v45
    %v52 = vpack.c.bf16 %v48, %v47
    %v53 = vpack.c.bf16 %v50, %v49
    %v54 = vld [vmem:[%s1] sm:$0x3]
    %vm55 = vcmask 23552
    %v57 = vsel %vm55, %v51, 0
    %v60 = vsel %vm55, %v52, 0
    %v63 = vsel %vm55, %v53, 0
    %vm65 = vcmask 1040384
    %vm66 = vcmask 1041408
    %v67 = vsel %vm65, 4294967295, 65535
    %v68 = vsel %vm66, %v67, 0
    %v70 = vand.u32 %v54, %v68
    %72 = vmatpush.bf16.msra.mxu0 0
    %73 = vmatpush.bf16.msra.mxu0 0
    %74 = vmatpush.bf16.msra.mxu0 0
    %75 = vmatpush.bf16.msra.mxu0 0
    %76 = vmatpush.bf16.msra.mxu0 0
    %77 = vmatpush.bf16.msra.mxu0 0
    %78 = vmatpush.bf16.msra.mxu0 0
    %79 = vmatpush.bf16.msra.mxu0 %v70
    %80 = vmatmul.bf16.gmra.mxu0 %v57
    %v81 = vpop.f32.mrf.mxu0
    %v82 = vadd.f32 0.0, %v81
    %v83 = vpop.f32.mrf.mxu0
    %v84 = vadd.f32 0.0, %v83
    %85 = vmatmul.bf16.gmra.mxu0 %v60
    %v86 = vpop.f32.mrf.mxu0
    %v87 = vadd.f32 0.0, %v86
    %v88 = vpop.f32.mrf.mxu0
    %v89 = vadd.f32 0.0, %v88
    %90 = vmatmul.bf16.gmra.mxu0 %v63
    %v91 = vpop.f32.mrf.mxu0
    %v92 = vadd.f32 0.0, %v91
    %v93 = vpop.f32.mrf.mxu0
    %v94 = vadd.f32 0.0, %v93
    %95 = vdwg.mxu0
    %v97 = vperm.slane %v44, 0
    %v99 = vadd.f32 %v97, %v82
    %v100 = vadd.f32 %v97, %v84
    %v101 = vadd.f32 %v97, %v87
    %v102 = vadd.f32 %v97, %v89
    %v103 = vadd.f32 %v97, %v92
    %v104 = vadd.f32 %v97, %v94
    %v105 = vxor.u32 %v99, 2147483648
    %v106 = vxor.u32 %v100, 2147483648
    %v107 = vxor.u32 %v101, 2147483648
    %v108 = vxor.u32 %v102, 2147483648
    %v109 = vxor.u32 %v103, 2147483648
    %v110 = vxor.u32 %v104, 2147483648
    %v111 = vmul.f32 %v105, 1.442695
    %v112 = vpow.pop %v111
    %v113 = vmul.f32 %v106, 1.442695
    %v114 = vpow.pop %v113
    %v115 = vmul.f32 %v107, 1.442695
    %v116 = vpow.pop %v115
    %v117 = vmul.f32 %v108, 1.442695
    %v118 = vpow.pop %v117
    %v119 = vmul.f32 %v109, 1.442695
    %v120 = vpow.pop %v119
    %v121 = vmul.f32 %v110, 1.442695
    %v122 = vpow.pop %v121
    %v123 = vadd.f32 %v112, 1.0
    %v124 = vadd.f32 %v114, 1.0
    %v125 = vadd.f32 %v116, 1.0
    %v126 = vadd.f32 %v118, 1.0
    %v127 = vadd.f32 %v120, 1.0
    %v128 = vadd.f32 %v122, 1.0
    %v129 = vrcp.pop %v123
    %v130 = vmul.f32 %v123, %v129
    %v131 = vsub.f32 1.0, %v130
    %v132 = vmul.f32 %v129, %v131
    %v133 = vadd.f32 %v129, %v132
    %vm134 = vweird.f32 %v123
    %vm135 = vweird.f32 %v129
    %vm136 = vmor %vm134, %vm135
    %v137 = vsel %vm136, %v129, %v133
    %v138 = vand.u32 2147483647, %v123
    %vm139 = vcmp.eq.f32.partialorder %v138, 8.507059e+37
    %v140 = vand.u32 %v123, 2147483648
    %v141 = vor.u32 1.1754944e-38, %v140
    %v142 = vsel %vm139, %v141, %v137
    %v143 = vmul.f32 1.0, %v142
    %v144 = vrcp.pop %v124
    %v145 = vmul.f32 %v124, %v144
    %v146 = vsub.f32 1.0, %v145
    %v147 = vmul.f32 %v144, %v146
    %v148 = vadd.f32 %v144, %v147
    %vm149 = vweird.f32 %v124
    %vm150 = vweird.f32 %v144
    %vm151 = vmor %vm149, %vm150
    %v152 = vsel %vm151, %v144, %v148
    %v153 = vand.u32 2147483647, %v124
    %vm154 = vcmp.eq.f32.partialorder %v153, 8.507059e+37
    %v155 = vand.u32 %v124, 2147483648
    %v156 = vor.u32 1.1754944e-38, %v155
    %v157 = vsel %vm154, %v156, %v152
    %v158 = vmul.f32 1.0, %v157
    %v159 = vrcp.pop %v125
    %v160 = vmul.f32 %v125, %v159
    %v161 = vsub.f32 1.0, %v160
    %v162 = vmul.f32 %v159, %v161
    %v163 = vadd.f32 %v159, %v162
    %vm164 = vweird.f32 %v125
    %vm165 = vweird.f32 %v159
    %vm166 = vmor %vm164, %vm165
    %v167 = vsel %vm166, %v159, %v163
    %v168 = vand.u32 2147483647, %v125
    %vm169 = vcmp.eq.f32.partialorder %v168, 8.507059e+37
    %v170 = vand.u32 %v125, 2147483648
    %v171 = vor.u32 1.1754944e-38, %v170
    %v172 = vsel %vm169, %v171, %v167
    %v173 = vmul.f32 1.0, %v172
    %v174 = vrcp.pop %v126
    %v175 = vmul.f32 %v126, %v174
    %v176 = vsub.f32 1.0, %v175
    %v177 = vmul.f32 %v174, %v176
    %v178 = vadd.f32 %v174, %v177
    %vm179 = vweird.f32 %v126
    %vm180 = vweird.f32 %v174
    %vm181 = vmor %vm179, %vm180
    %v182 = vsel %vm181, %v174, %v178
    %v183 = vand.u32 2147483647, %v126
    %vm184 = vcmp.eq.f32.partialorder %v183, 8.507059e+37
    %v185 = vand.u32 %v126, 2147483648
    %v186 = vor.u32 1.1754944e-38, %v185
    %v187 = vsel %vm184, %v186, %v182
    %v188 = vmul.f32 1.0, %v187
    %v189 = vrcp.pop %v127
    %v190 = vmul.f32 %v127, %v189
    %v191 = vsub.f32 1.0, %v190
    %v192 = vmul.f32 %v189, %v191
    %v193 = vadd.f32 %v189, %v192
    %vm194 = vweird.f32 %v127
    %vm195 = vweird.f32 %v189
    %vm196 = vmor %vm194, %vm195
    %v197 = vsel %vm196, %v189, %v193
    %v198 = vand.u32 2147483647, %v127
    %vm199 = vcmp.eq.f32.partialorder %v198, 8.507059e+37
    %v200 = vand.u32 %v127, 2147483648
    %v201 = vor.u32 1.1754944e-38, %v200
    %v202 = vsel %vm199, %v201, %v197
    %v203 = vmul.f32 1.0, %v202
    %v204 = vrcp.pop %v128
    %v205 = vmul.f32 %v128, %v204
    %v206 = vsub.f32 1.0, %v205
    %v207 = vmul.f32 %v204, %v206
    %v208 = vadd.f32 %v204, %v207
    %vm209 = vweird.f32 %v128
    %vm210 = vweird.f32 %v204
    %vm211 = vmor %vm209, %vm210
    %v212 = vsel %vm211, %v204, %v208
    %v213 = vand.u32 2147483647, %v128
    %vm214 = vcmp.eq.f32.partialorder %v213, 8.507059e+37
    %v215 = vand.u32 %v128, 2147483648
    %v216 = vor.u32 1.1754944e-38, %v215
    %v217 = vsel %vm214, %v216, %v212
    %v218 = vmul.f32 1.0, %v217
    %v219 = vmul.f32 %v99, %v143
    %v220 = vmul.f32 %v100, %v158
    %v221 = vmul.f32 %v101, %v173
    %v222 = vmul.f32 %v102, %v188
    %v223 = vmul.f32 %v103, %v203
    %v224 = vmul.f32 %v104, %v218
    %v225 = vpack.c.bf16 %v220, %v219
    %v226 = vpack.c.bf16 %v222, %v221
    %v227 = vpack.c.bf16 %v224, %v223
    %v228 = vld [vmem:[#allocation2] sm:$0xf]
    %v229 = vld [vmem:[#allocation2 + $0x4] sm:$0xf]
    %v230 = vld [vmem:[#allocation2 + $0x8] sm:$0xf]
    %v231 = vld [vmem:[#allocation2 + $0xc] sm:$0xf]
    %v232 = vld [vmem:[#allocation2 + $0x10] sm:$0xf]
    %v233 = vld [vmem:[#allocation2 + $0x14] sm:$0xf]
    %v234 = vld [vmem:[#allocation2 + $0x18] sm:$0xf]
    %v235 = vld [vmem:[#allocation2 + $0x1c] sm:$0xf]
    %v236 = vld [vmem:[#allocation2 + $0x20] sm:$0xf]
    %v237 = vld [vmem:[#allocation2 + $0x24] sm:$0xf]
    %v238 = vld [vmem:[#allocation2 + $0x28] sm:$0xf]
    %v239 = vld [vmem:[#allocation2 + $0x2c] sm:$0xf]
    %v240 = vld [vmem:[#allocation2 + $0x30] sm:$0xf]
    %v241 = vld [vmem:[#allocation2 + $0x34] sm:$0xf]
    %v242 = vld [vmem:[#allocation2 + $0x38] sm:$0xf]
    %v243 = vld [vmem:[#allocation2 + $0x3c] sm:$0xf]
    %v244 = vld [vmem:[%s4] sm:$0x1]
    %v246 = vperm.slane %v244, 0
    %v264 = vunpack.c.l.b16 %v228
    %v265 = vunpack.c.l.b16 %v229
    %v266 = vunpack.c.l.b16 %v230
    %v267 = vunpack.c.l.b16 %v231
    %v268 = vunpack.c.l.b16 %v232
    %v269 = vunpack.c.l.b16 %v233
    %v270 = vunpack.c.l.b16 %v234
    %v271 = vunpack.c.l.b16 %v235
    %v272 = vunpack.c.l.b16 %v236
    %v273 = vunpack.c.l.b16 %v237
    %v274 = vunpack.c.l.b16 %v238
    %v275 = vunpack.c.l.b16 %v239
    %v276 = vunpack.c.l.b16 %v240
    %v277 = vunpack.c.l.b16 %v241
    %v278 = vunpack.c.l.b16 %v242
    %v279 = vunpack.c.l.b16 %v243
    %v280 = vpack.c.b16 %v265, %v264
    %v281 = vpack.c.b16 %v267, %v266
    %v282 = vpack.c.b16 %v269, %v268
    %v283 = vpack.c.b16 %v271, %v270
    %v284 = vpack.c.b16 %v273, %v272
    %v285 = vpack.c.b16 %v275, %v274
    %v286 = vpack.c.b16 %v277, %v276
    %v287 = vpack.c.b16 %v279, %v278
    %296 = vmatpush.bf16.msra.mxu0 %v287
    %297 = vmatpush.bf16.msra.mxu0 %v286
    %298 = vmatpush.bf16.msra.mxu0 %v285
    %299 = vmatpush.bf16.msra.mxu0 %v284
    %300 = vmatpush.bf16.msra.mxu0 %v283
    %301 = vmatpush.bf16.msra.mxu0 %v282
    %302 = vmatpush.bf16.msra.mxu0 %v281
    %303 = vmatpush.bf16.msra.mxu0 %v280
    %304 = vmatmul.bf16.gmra.mxu0 %v225
    %v305 = vpop.f32.mrf.mxu0
    %v306 = vadd.f32 %v246, %v305
    %v307 = vpop.f32.mrf.mxu0
    %v308 = vadd.f32 %v246, %v307
    %309 = vmatmul.bf16.gmra.mxu0 %v226
    %v310 = vpop.f32.mrf.mxu0
    %v311 = vadd.f32 %v246, %v310
    %v312 = vpop.f32.mrf.mxu0
    %v313 = vadd.f32 %v246, %v312
    %314 = vmatmul.bf16.gmra.mxu0 %v227
    %v315 = vpop.f32.mrf.mxu0
    %v316 = vadd.f32 %v246, %v315
    %v317 = vpop.f32.mrf.mxu0
    %v318 = vadd.f32 %v246, %v317
    %319 = vdwg.mxu0
    %320 = vadd.xlane.f32.xlu0 %v306
    %v321 = vpop.xlane.xlu0 %320
    %322 = vadd.xlane.f32.xlu0 %v308
    %v323 = vpop.xlane.xlu0 %322
    %324 = vadd.xlane.f32.xlu0 %v311
    %v325 = vpop.xlane.xlu0 %324
    %326 = vadd.xlane.f32.xlu0 %v313
    %v327 = vpop.xlane.xlu0 %326
    %328 = vadd.xlane.f32.xlu0 %v316
    %v329 = vpop.xlane.xlu0 %328
    %330 = vadd.xlane.f32.xlu0 %v318
    %v331 = vpop.xlane.xlu0 %330
    %v332 = vrcp.pop 128.0
    %v333 = vmul.f32 128.0, %v332
    %v334 = vsub.f32 1.0, %v333
    %v335 = vmul.f32 %v332, %v334
    %v336 = vadd.f32 %v332, %v335
    %vm337 = vweird.f32 %v332
    %v338 = vsel %vm337, %v332, %v336
    %v339 = vmul.f32 %v321, %v338
    %v340 = vmul.f32 %v323, %v338
    %v341 = vmul.f32 %v325, %v338
    %v342 = vmul.f32 %v327, %v338
    %v343 = vmul.f32 %v329, %v338
    %v344 = vmul.f32 %v331, %v338
    %v345 = vsub.f32 %v306, %v339
    %v346 = vsub.f32 %v308, %v340
    %v347 = vsub.f32 %v311, %v341
    %v348 = vsub.f32 %v313, %v342
    %v349 = vsub.f32 %v316, %v343
    %v350 = vsub.f32 %v318, %v344
    %v351 = vmul.f32 %v345, %v345
    %v352 = vmul.f32 %v346, %v346
    %v353 = vmul.f32 %v347, %v347
    %v354 = vmul.f32 %v348, %v348
    %v355 = vmul.f32 %v349, %v349
    %v356 = vmul.f32 %v350, %v350
    %357 = vadd.xlane.f32.xlu0 %v351
    %v358 = vpop.xlane.xlu0 %357
    %359 = vadd.xlane.f32.xlu0 %v352
    %v360 = vpop.xlane.xlu0 %359
    %361 = vadd.xlane.f32.xlu0 %v353
    %v362 = vpop.xlane.xlu0 %361
    %363 = vadd.xlane.f32.xlu0 %v354
    %v364 = vpop.xlane.xlu0 %363
    %365 = vadd.xlane.f32.xlu0 %v355
    %v366 = vpop.xlane.xlu0 %365
    %367 = vadd.xlane.f32.xlu0 %v356
    %v368 = vpop.xlane.xlu0 %367
    %v369 = vmul.f32 %v358, %v338
    %v370 = vmul.f32 %v360, %v338
    %v371 = vmul.f32 %v362, %v338
    %v372 = vmul.f32 %v364, %v338
    %v373 = vmul.f32 %v366, %v338
    %v374 = vmul.f32 %v368, %v338
    %v375 = vadd.f32 %v369, 1e-05
    %v376 = vadd.f32 %v370, 1e-05
    %v377 = vadd.f32 %v371, 1e-05
    %v378 = vadd.f32 %v372, 1e-05
    %v379 = vadd.f32 %v373, 1e-05
    %v380 = vadd.f32 %v374, 1e-05
    %v381 = vrsqrt.pop %v375
    %v382 = vmul.f32 %v381, %v375
    %v383 = vmul.f32 %v382, %v381
    %v384 = vmul.f32 0.5, %v383
    %v385 = vsub.f32 1.5, %v384
    %v386 = vmul.f32 %v381, %v385
    %vm387 = vweird.f32 %v375
    %vm388 = vweird.f32 %v381
    %vm389 = vmor %vm387, %vm388
    %v390 = vsel %vm389, %v381, %v386
    %v391 = vrsqrt.pop %v376
    %v392 = vmul.f32 %v391, %v376
    %v393 = vmul.f32 %v392, %v391
    %v394 = vmul.f32 0.5, %v393
    %v395 = vsub.f32 1.5, %v394
    %v396 = vmul.f32 %v391, %v395
    %vm397 = vweird.f32 %v376
    %vm398 = vweird.f32 %v391
    %vm399 = vmor %vm397, %vm398
    %v400 = vsel %vm399, %v391, %v396
    %v401 = vrsqrt.pop %v377
    %v402 = vmul.f32 %v401, %v377
    %v403 = vmul.f32 %v402, %v401
    %v404 = vmul.f32 0.5, %v403
    %v405 = vsub.f32 1.5, %v404
    %v406 = vmul.f32 %v401, %v405
    %vm407 = vweird.f32 %v377
    %vm408 = vweird.f32 %v401
    %vm409 = vmor %vm407, %vm408
    %v410 = vsel %vm409, %v401, %v406
    %v411 = vrsqrt.pop %v378
    %v412 = vmul.f32 %v411, %v378
    %v413 = vmul.f32 %v412, %v411
    %v414 = vmul.f32 0.5, %v413
    %v415 = vsub.f32 1.5, %v414
    %v416 = vmul.f32 %v411, %v415
    %vm417 = vweird.f32 %v378
    %vm418 = vweird.f32 %v411
    %vm419 = vmor %vm417, %vm418
    %v420 = vsel %vm419, %v411, %v416
    %v421 = vrsqrt.pop %v379
    %v422 = vmul.f32 %v421, %v379
    %v423 = vmul.f32 %v422, %v421
    %v424 = vmul.f32 0.5, %v423
    %v425 = vsub.f32 1.5, %v424
    %v426 = vmul.f32 %v421, %v425
    %vm427 = vweird.f32 %v379
    %vm428 = vweird.f32 %v421
    %vm429 = vmor %vm427, %vm428
    %v430 = vsel %vm429, %v421, %v426
    %v431 = vrsqrt.pop %v380
    %v432 = vmul.f32 %v431, %v380
    %v433 = vmul.f32 %v432, %v431
    %v434 = vmul.f32 0.5, %v433
    %v435 = vsub.f32 1.5, %v434
    %v436 = vmul.f32 %v431, %v435
    %vm437 = vweird.f32 %v380
    %vm438 = vweird.f32 %v431
    %vm439 = vmor %vm437, %vm438
    %v440 = vsel %vm439, %v431, %v436
    %v441 = vmul.f32 %v345, %v390
    %v442 = vmul.f32 %v346, %v400
    %v443 = vmul.f32 %v347, %v410
    %v444 = vmul.f32 %v348, %v420
    %v445 = vmul.f32 %v349, %v430
    %v446 = vmul.f32 %v350, %v440
    %v447 = vld [vmem:[%s5] sm:$0x1]
    %v449 = vperm.slane %v447, 0
    %v451 = vmul.f32 %v441, %v449
    %v452 = vmul.f32 %v442, %v449
    %v453 = vmul.f32 %v443, %v449
    %v454 = vmul.f32 %v444, %v449
    %v455 = vmul.f32 %v445, %v449
    %v456 = vmul.f32 %v446, %v449
    %v457 = vld [vmem:[%s6] sm:$0x1]
    %v459 = vperm.slane %v457, 0
    %v461 = vadd.f32 %v451, %v459
    %v462 = vadd.f32 %v452, %v459
    %v463 = vadd.f32 %v453, %v459
    %v464 = vadd.f32 %v454, %v459
    %v465 = vadd.f32 %v455, %v459
    %v466 = vadd.f32 %v456, %v459
    %v467 = vpack.c.bf16 %v461, %v461
    %v468 = vpack.c.bf16 %v462, %v462
    %v469 = vpack.c.bf16 %v463, %v463
    %v470 = vpack.c.bf16 %v464, %v464
    %v471 = vpack.c.bf16 %v465, %v465
    %v472 = vpack.c.bf16 %v466, %v466
    %473 = vst [vmem:[#allocation5] sm:$0xf] %v467
    %474 = vst [vmem:[#allocation5 + $0x4] sm:$0xf] %v468
    %475 = vst [vmem:[#allocation5 + $0x8] sm:$0xf] %v469
    %476 = vst [vmem:[#allocation5 + $0xc] sm:$0xf] %v470
    %477 = vst [vmem:[#allocation5 + $0x10] sm:$0xf] %v471
    %478 = vst [vmem:[#allocation5 + $0x14] sm:$0xf] %v472
    // Predicated region
    $region34: #{tpu_custom_call.1} parent=1 // pred_check
      _
    $region35: #{tpu_custom_call.1} parent=1 // pred_check_branch
      %480 = sbr.rel (0) target = $region37
    $region36: #{tpu_custom_call.1} parent=1 // pred_region
      %482 = vsyncadd [#allocation4], 0
      %s483 = sshll.u32 [#allocation5], 4
      %s484 = int_to_ptr.vmem [resolvable:$true] %s483
      %s485 = sshll.u32 %s7, 4
      %s486 = int_to_ptr.hbm [resolvable:$true] %s485
      %491 = dma.vmem_to_hbm [thread:$0]  %s484, 384, %s486, [#allocation4], 64, 64, 4
    $region37: #{tpu_custom_call.1} parent=1 // pred_fallthru
      _
    // Predicated region
    $region38: #{tpu_custom_call.1} parent=1 // pred_check
      _
    $region39: #{tpu_custom_call.1} parent=1 // pred_check_branch
      %493 = sbr.rel (0) target = $region41
    $region40: #{tpu_custom_call.1} parent=1 // pred_region
      %495 = dma.done [#allocation4], 384
    $region41: #{tpu_custom_call.1} parent=1 // pred_fallthru
      _
    %496 = vsyncpa [#allocation3], 1
    %497 = vsyncpa [#allocation4], 1

</llo_original>
